<compile_context>
chip_gen: v6e
topology: v6e:2x2x1
jax: 0.10.0
libtpu: 0.0.40
codegen_flags: <defaults>
</compile_context>

<pallas_src>
import functools

import jax
import jax.numpy as jnp
import numpy as np
from jax.experimental import pallas as pl
from jax.experimental.pallas import tpu as pltpu

_BIAS_STRIDE = 8  # each bias occupies its own 8-row (sublane-aligned) slot


def _round_up(n, m):
    return -(-n // m) * m


def _pack_params(params, latent_dim):
    """Split the joint loc/logvar head and pack all weights/biases into two arrays.

    Returns (wpack, bpack, row_offsets, dims) where `dims[i] = (fan_in, fan_out)`
    and layer i's weight lives at wpack[row_offsets[i]:+fan_in, :fan_out] and its
    bias at bpack[_BIAS_STRIDE*i, :fan_out].
    Layer order: enc1, enc2, enc_loc, enc_logvar, dec1, dec2, dec3.
    """
    we1, be1, we2, be2, we3, be3, wd1, bd1, wd2, bd2, wd3, bd3 = params
    L = latent_dim

    def as_row(b):
        return jnp.asarray(b, jnp.float32).reshape(1, -1)

    be1, be2, be3 = as_row(be1), as_row(be2), as_row(be3)
    bd1, bd2, bd3 = as_row(bd1), as_row(bd2), as_row(bd3)

    # Split the (H/2, 2L) head into two (H/2, L) heads -> lane-aligned results.
    w_loc, w_lv = we3[:, :L], we3[:, L:]
    b_loc, b_lv = be3[:, :L], be3[:, L:]

    weights = [we1, we2, w_loc, w_lv, wd1, wd2, wd3]
    biases = [be1, be2, b_loc, b_lv, bd1, bd2, bd3]

    wmax = max(int(w.shape[1]) for w in weights)
    dims = tuple((int(w.shape[0]), int(w.shape[1])) for w in weights)

    row_offsets = []
    blocks = []
    row = 0
    for w in weights:
        fin, fout = int(w.shape[0]), int(w.shape[1])
        row_offsets.append(row)
        rows_p = _round_up(fin, 8)  # keep every block sublane-aligned
        blk = jnp.zeros((rows_p, wmax), jnp.float32).at[:fin, :fout].set(
            jnp.asarray(w, jnp.float32))
        blocks.append(blk)
        row += rows_p
    wpack = jnp.concatenate(blocks, axis=0)

    bpack = jnp.zeros((_BIAS_STRIDE * len(biases), wmax), jnp.float32)
    for i, b in enumerate(biases):
        fout = int(b.shape[1])
        bpack = bpack.at[_BIAS_STRIDE * i:_BIAS_STRIDE * i + 1, :fout].set(b)

    return wpack, bpack, tuple(row_offsets), dims


def _make_bvae_kernel(B, D, L, row_offs, dims):
    f32 = jnp.float32

    def kernel(bc_ref, x_ref, noise_ref, wpack_ref, bpack_ref,
               loc_ref, scale_ref, z_ref, xrec_ref, losses_ref):
        x = x_ref[...]                                  # (B, D)
        bc = bc_ref[0]                                  # SMEM scalar

        def layer(h, idx):
            r0 = row_offs[idx]
            fin, fout = dims[idx]
            w = wpack_ref[r0:r0 + fin, 0:fout]          # static, aligned slice
            b = bpack_ref[_BIAS_STRIDE * idx:_BIAS_STRIDE * idx + 1, 0:fout]
            return jnp.dot(h, w, preferred_element_type=f32) + b

        # ---------------- Gaussian encoder (depth = 2) ----------------
        h = jnp.tanh(layer(x, 0))                       # (B, H)
        h = jnp.tanh(layer(h, 1))                       # (B, H/2)
        loc = layer(h, 2)                               # (B, L)
        logvar = layer(h, 3)                            # (B, L)

        # scale = softplus(logvar) + eps  (stable form)
        scale = (jnp.maximum(logvar, 0.0)
                 + jnp.log(1.0 + jnp.exp(-jnp.abs(logvar)))
                 + 1e-8)

        # rsample of MVN(loc, diag(scale)): loc + scale * eps
        z = loc + scale * noise_ref[...]                # (B, L)

        # ---------------- Bernoulli decoder (depth = 2) ----------------
        d = jnp.tanh(layer(z, 4))                       # (B, H/2)
        d = jnp.tanh(layer(d, 5))                       # (B, H)
        logits = layer(d, 6)                            # (B, D)

        # sigmoid via EUP exp + approx reciprocal (output only; loss uses logits)
        x_recon = pl.reciprocal(1.0 + jnp.exp(-logits), approx=True)

        # ---------------- losses ----------------
        # BCE(sigmoid(logits), target) computed directly from logits.
        target = x + bc
        bce = (jnp.maximum(logits, 0.0) - logits * target
               + jnp.log(1.0 + jnp.exp(-jnp.abs(logits))))           # (B, D)
        recon_per = jnp.sum(bce, axis=-1, keepdims=True)             # (B, 1)

        # KL( N(loc, diag(scale)) || N(0, I) ) per sample
        kl_per = (0.5 * jnp.sum(scale * scale + loc * loc - 1.0,
                                axis=-1, keepdims=True)
                  - jnp.sum(jnp.log(scale), axis=-1, keepdims=True))  # (B, 1)

        lrec = jnp.mean(recon_per, axis=0, keepdims=True)            # (1, 1)
        lkl = jnp.mean(kl_per, axis=0, keepdims=True)                # (1, 1)

        # Single (1, 2) output [loss_recon, loss_kl] without lane concat.
        lane = jax.lax.broadcasted_iota(jnp.int32, (1, 2), 1)
        losses_ref[...] = jnp.where(lane == 0, lrec, lkl)

        # ---------------- write outputs ----------------
        loc_ref[...] = loc
        scale_ref[...] = scale
        z_ref[...] = z
        xrec_ref[...] = x_recon

    return kernel


@functools.partial(jax.jit, static_argnames=())
def bvae_forward(x, bias_correction, noise, params):
    """BVAE forward pass (training mode, compute_loss=True).

    x:               (B, D) float32, e.g. x_true - 0.5
    bias_correction: scalar float (e.g. 0.5) so the BCE target x + bc is in [0, 1]
    noise:           (B, L) float32 standard-normal noise for rsample
    params:          flat list of 12 arrays (enc W1,b1,W2,b2,W3,b3, dec W1,b1,W2,b2,W3,b3)
                     with weights stored as (in_features, out_features).
    """
    B, D = x.shape
    L = noise.shape[1]
    f32 = jnp.float32

    wpack, bpack, row_offs, dims = _pack_params(params, L)
    bc = jnp.asarray(bias_correction, f32).reshape((1,))

    kernel = _make_bvae_kernel(B, D, L, row_offs, dims)

    vmem = pl.BlockSpec(memory_space=pltpu.MemorySpace.VMEM)
    smem = pl.BlockSpec(memory_space=pltpu.MemorySpace.SMEM)

    out_shape = (
        jax.ShapeDtypeStruct((B, L), f32),   # z_dist loc
        jax.ShapeDtypeStruct((B, L), f32),   # z_dist scale (diag of scale_tril)
        jax.ShapeDtypeStruct((B, L), f32),   # z_sample
        jax.ShapeDtypeStruct((B, D), f32),   # x_recon
        jax.ShapeDtypeStruct((1, 2), f32),   # [loss_recon, loss_kl]
    )

    # Advisory cost estimate for the XLA scheduler.
    H, H2 = dims[0][1], dims[1][1]
    flops = int(sum(2 * B * fin * fout for fin, fout in dims))
    transcendentals = int(B * (2 * (H + H2) + 3 * L + 3 * D))
    bytes_accessed = int(4 * (x.size + noise.size + wpack.size + bpack.size + 1
                              + 3 * B * L + B * D + 2))

    outs = pl.pallas_call(
        kernel,
        out_shape=out_shape,
        in_specs=[smem, vmem, vmem, vmem, vmem],
        out_specs=tuple([vmem] * len(out_shape)),
        cost_estimate=pl.CostEstimate(flops=flops,
                                      transcendentals=transcendentals,
                                      bytes_accessed=bytes_accessed),
    )(bc, x, noise, wpack, bpack)

    loc, scale, z_sample, x_recon, losses = outs
    loss_recon = losses[0, 0]
    loss_kl = losses[0, 1]
    # TODO(synk): torch.distributions.MultivariateNormal object has no Pallas
    # equivalent; the distribution is returned as its (loc, scale) parameters.
    return {
        "z_dist_loc": loc,
        "z_dist_scale": scale,
        "z_sample": z_sample,
        "x_recon": x_recon,
        "loss": loss_recon + loss_kl,
        "loss_recon": loss_recon,
        "loss_kl": loss_kl,
    }


def _linear_params(key, fan_in, fan_out):
    """Deterministic init mimicking torch.nn.Linear default U[-1/sqrt(in), 1/sqrt(in)]."""
    kw, kb = jax.random.split(key)
    bound = 1.0 / np.sqrt(fan_in)
    w = jax.random.uniform(kw, (fan_in, fan_out), jnp.float32, -bound, bound)
    b = jax.random.uniform(kb, (1, fan_out), jnp.float32, -bound, bound)
    return w, b


def make_bvae_params(key, input_dim, hidden_dim, latent_dim, depth=2):
    assert depth == 2, "this synthetic setup instantiates the depth=2 branch"
    keys = jax.random.split(key, 6)
    # Encoder: D -> H -> H/2 -> 2L
    we1, be1 = _linear_params(keys[0], input_dim, hidden_dim)
    we2, be2 = _linear_params(keys[1], hidden_dim, hidden_dim // 2)
    we3, be3 = _linear_params(keys[2], hidden_dim // 2, 2 * latent_dim)
    # Decoder: L -> H/2 -> H -> D
    wd1, bd1 = _linear_params(keys[3], latent_dim, hidden_dim // 2)
    wd2, bd2 = _linear_params(keys[4], hidden_dim // 2, hidden_dim)
    wd3, bd3 = _linear_params(keys[5], hidden_dim, input_dim)
    return [we1, be1, we2, be2, we3, be3, wd1, bd1, wd2, bd2, wd3, bd3]


if __name__ == "__main__":
    # Small config consistent with the module: flat vector inputs.
    B, INPUT_DIM, HIDDEN_DIM, LATENT_DIM, DEPTH = 8, 32, 32, 8, 2

    root = jax.random.PRNGKey(0)
    k_params, k_x, k_noise = jax.random.split(root, 3)

    params = make_bvae_params(k_params, INPUT_DIM, HIDDEN_DIM, LATENT_DIM, DEPTH)

    # MNIST-style convention from the module docstring: x = x_true - 0.5,
    # bias_correction = +0.5 so the BCE target (x + bias_correction) is in [0, 1].
    x_true = jax.random.uniform(k_x, (B, INPUT_DIM), jnp.float32, 0.0, 1.0)
    x = x_true - 0.5
    bias_correction = 0.5

    # Reparameterization noise for z_dist.rsample() (deterministic here).
    noise = jax.random.normal(k_noise, (B, LATENT_DIM), jnp.float32)

    out = bvae_forward(x, bias_correction, noise, params)
    jax.block_until_ready(out)

    # Basic sanity: shapes and finiteness.
    assert out["x_recon"].shape == (B, INPUT_DIM)
    assert out["z_sample"].shape == (B, LATENT_DIM)
    assert out["z_dist_loc"].shape == (B, LATENT_DIM)
    assert out["z_dist_scale"].shape == (B, LATENT_DIM)
    assert bool(jnp.isfinite(out["loss"]))
    assert bool(jnp.isfinite(out["loss_recon"]))
    assert bool(jnp.isfinite(out["loss_kl"]))
    print("KERNEL_OK")
</pallas_src>

<mosaic_0001>
module attributes {stable_mosaic.version = 11 : i64} {
  func.func @kernel(%arg0: memref<1xf32, #tpu.memory_space<smem>>, %arg1: memref<8x32xf32, #tpu.memory_space<vmem>>, %arg2: memref<8x8xf32, #tpu.memory_space<vmem>>, %arg3: memref<152x32xf32, #tpu.memory_space<vmem>>, %arg4: memref<56x32xf32, #tpu.memory_space<vmem>>, %arg5: memref<8x8xf32, #tpu.memory_space<vmem>>, %arg6: memref<8x8xf32, #tpu.memory_space<vmem>>, %arg7: memref<8x8xf32, #tpu.memory_space<vmem>>, %arg8: memref<8x32xf32, #tpu.memory_space<vmem>>, %arg9: memref<1x2xf32, #tpu.memory_space<vmem>>) attributes {dimension_semantics = [], scalar_prefetch = 0 : i64, scratch_operands = 0 : i64, tpu.core_type = #tpu.core_type<tc>} {
    %c0 = arith.constant 0 : index
    %c0_0 = arith.constant 0 : index
    %0 = vector.load %arg1[%c0, %c0_0] : memref<8x32xf32, #tpu.memory_space<vmem>>, vector<8x32xf32>
    %c0_1 = arith.constant 0 : index
    %1 = memref.load %arg0[%c0_1] : memref<1xf32, #tpu.memory_space<smem>>
    %c0_2 = arith.constant 0 : index
    %c0_3 = arith.constant 0 : index
    %2 = vector.load %arg3[%c0_2, %c0_3] : memref<152x32xf32, #tpu.memory_space<vmem>>, vector<32x32xf32>
    %c0_4 = arith.constant 0 : index
    %c0_5 = arith.constant 0 : index
    %3 = vector.load %arg4[%c0_4, %c0_5] : memref<56x32xf32, #tpu.memory_space<vmem>>, vector<1x32xf32>
    %cst = arith.constant dense<0.000000e+00> : vector<8x32xf32>
    %4 = tpu.matmul %0, %2, %cst {dimension_numbers = #tpu.dot_dimension_numbers<[1], [0], [0], [1], [0, 0, 1, 1], [], []>} : vector<8x32xf32>, vector<32x32xf32>, vector<8x32xf32> -> vector<8x32xf32>
    %5 = vector.broadcast %3 : vector<1x32xf32> to vector<8x32xf32>
    %6 = arith.addf %4, %5 : vector<8x32xf32>
    %7 = math.tanh %6 : vector<8x32xf32>
    %c32 = arith.constant 32 : index
    %c0_6 = arith.constant 0 : index
    %8 = vector.load %arg3[%c32, %c0_6] : memref<152x32xf32, #tpu.memory_space<vmem>>, vector<32x16xf32>
    %c8 = arith.constant 8 : index
    %c0_7 = arith.constant 0 : index
    %9 = vector.load %arg4[%c8, %c0_7] : memref<56x32xf32, #tpu.memory_space<vmem>>, vector<1x16xf32>
    %cst_8 = arith.constant dense<0.000000e+00> : vector<8x16xf32>
    %10 = tpu.matmul %7, %8, %cst_8 {dimension_numbers = #tpu.dot_dimension_numbers<[1], [0], [0], [1], [0, 0, 1, 1], [], []>} : vector<8x32xf32>, vector<32x16xf32>, vector<8x16xf32> -> vector<8x16xf32>
    %11 = vector.broadcast %9 : vector<1x16xf32> to vector<8x16xf32>
    %12 = arith.addf %10, %11 : vector<8x16xf32>
    %13 = math.tanh %12 : vector<8x16xf32>
    %c64 = arith.constant 64 : index
    %c0_9 = arith.constant 0 : index
    %14 = vector.load %arg3[%c64, %c0_9] : memref<152x32xf32, #tpu.memory_space<vmem>>, vector<16x8xf32>
    %c16 = arith.constant 16 : index
    %c0_10 = arith.constant 0 : index
    %15 = vector.load %arg4[%c16, %c0_10] : memref<56x32xf32, #tpu.memory_space<vmem>>, vector<1x8xf32>
    %cst_11 = arith.constant dense<0.000000e+00> : vector<8x8xf32>
    %16 = tpu.matmul %13, %14, %cst_11 {dimension_numbers = #tpu.dot_dimension_numbers<[1], [0], [0], [1], [0, 0, 1, 1], [], []>} : vector<8x16xf32>, vector<16x8xf32>, vector<8x8xf32> -> vector<8x8xf32>
    %17 = vector.broadcast %15 : vector<1x8xf32> to vector<8x8xf32>
    %18 = arith.addf %16, %17 : vector<8x8xf32>
    %c80 = arith.constant 80 : index
    %c0_12 = arith.constant 0 : index
    %19 = vector.load %arg3[%c80, %c0_12] : memref<152x32xf32, #tpu.memory_space<vmem>>, vector<16x8xf32>
    %c24 = arith.constant 24 : index
    %c0_13 = arith.constant 0 : index
    %20 = vector.load %arg4[%c24, %c0_13] : memref<56x32xf32, #tpu.memory_space<vmem>>, vector<1x8xf32>
    %cst_14 = arith.constant dense<0.000000e+00> : vector<8x8xf32>
    %21 = tpu.matmul %13, %19, %cst_14 {dimension_numbers = #tpu.dot_dimension_numbers<[1], [0], [0], [1], [0, 0, 1, 1], [], []>} : vector<8x16xf32>, vector<16x8xf32>, vector<8x8xf32> -> vector<8x8xf32>
    %22 = vector.broadcast %20 : vector<1x8xf32> to vector<8x8xf32>
    %23 = arith.addf %21, %22 : vector<8x8xf32>
    %cst_15 = arith.constant 0.000000e+00 : f32
    %24 = vector.broadcast %cst_15 : f32 to vector<8x8xf32>
    %25 = arith.maximumf %23, %24 : vector<8x8xf32>
    %26 = math.absf %23 : vector<8x8xf32>
    %cst_16 = arith.constant 0.000000e+00 : f32
    %27 = vector.broadcast %cst_16 : f32 to vector<8x8xf32>
    %28 = arith.subf %27, %26 : vector<8x8xf32>
    %29 = math.exp %28 : vector<8x8xf32>
    %cst_17 = arith.constant 1.000000e+00 : f32
    %30 = vector.broadcast %cst_17 : f32 to vector<8x8xf32>
    %31 = arith.addf %30, %29 : vector<8x8xf32>
    %32 = math.log %31 : vector<8x8xf32>
    %33 = arith.addf %25, %32 : vector<8x8xf32>
    %cst_18 = arith.constant 9.99999993E-9 : f32
    %34 = vector.broadcast %cst_18 : f32 to vector<8x8xf32>
    %35 = arith.addf %33, %34 : vector<8x8xf32>
    %c0_19 = arith.constant 0 : index
    %c0_20 = arith.constant 0 : index
    %36 = vector.load %arg2[%c0_19, %c0_20] : memref<8x8xf32, #tpu.memory_space<vmem>>, vector<8x8xf32>
    %37 = arith.mulf %35, %36 : vector<8x8xf32>
    %38 = arith.addf %18, %37 : vector<8x8xf32>
    %c96 = arith.constant 96 : index
    %c0_21 = arith.constant 0 : index
    %39 = vector.load %arg3[%c96, %c0_21] : memref<152x32xf32, #tpu.memory_space<vmem>>, vector<8x16xf32>
    %c32_22 = arith.constant 32 : index
    %c0_23 = arith.constant 0 : index
    %40 = vector.load %arg4[%c32_22, %c0_23] : memref<56x32xf32, #tpu.memory_space<vmem>>, vector<1x16xf32>
    %cst_24 = arith.constant dense<0.000000e+00> : vector<8x16xf32>
    %41 = tpu.matmul %38, %39, %cst_24 {dimension_numbers = #tpu.dot_dimension_numbers<[1], [0], [0], [1], [0, 0, 1, 1], [], []>} : vector<8x8xf32>, vector<8x16xf32>, vector<8x16xf32> -> vector<8x16xf32>
    %42 = vector.broadcast %40 : vector<1x16xf32> to vector<8x16xf32>
    %43 = arith.addf %41, %42 : vector<8x16xf32>
    %44 = math.tanh %43 : vector<8x16xf32>
    %c104 = arith.constant 104 : index
    %c0_25 = arith.constant 0 : index
    %45 = vector.load %arg3[%c104, %c0_25] : memref<152x32xf32, #tpu.memory_space<vmem>>, vector<16x32xf32>
    %c40 = arith.constant 40 : index
    %c0_26 = arith.constant 0 : index
    %46 = vector.load %arg4[%c40, %c0_26] : memref<56x32xf32, #tpu.memory_space<vmem>>, vector<1x32xf32>
    %cst_27 = arith.constant dense<0.000000e+00> : vector<8x32xf32>
    %47 = tpu.matmul %44, %45, %cst_27 {dimension_numbers = #tpu.dot_dimension_numbers<[1], [0], [0], [1], [0, 0, 1, 1], [], []>} : vector<8x16xf32>, vector<16x32xf32>, vector<8x32xf32> -> vector<8x32xf32>
    %48 = vector.broadcast %46 : vector<1x32xf32> to vector<8x32xf32>
    %49 = arith.addf %47, %48 : vector<8x32xf32>
    %50 = math.tanh %49 : vector<8x32xf32>
    %c120 = arith.constant 120 : index
    %c0_28 = arith.constant 0 : index
    %51 = vector.load %arg3[%c120, %c0_28] : memref<152x32xf32, #tpu.memory_space<vmem>>, vector<32x32xf32>
    %c48 = arith.constant 48 : index
    %c0_29 = arith.constant 0 : index
    %52 = vector.load %arg4[%c48, %c0_29] : memref<56x32xf32, #tpu.memory_space<vmem>>, vector<1x32xf32>
    %cst_30 = arith.constant dense<0.000000e+00> : vector<8x32xf32>
    %53 = tpu.matmul %50, %51, %cst_30 {dimension_numbers = #tpu.dot_dimension_numbers<[1], [0], [0], [1], [0, 0, 1, 1], [], []>} : vector<8x32xf32>, vector<32x32xf32>, vector<8x32xf32> -> vector<8x32xf32>
    %54 = vector.broadcast %52 : vector<1x32xf32> to vector<8x32xf32>
    %55 = arith.addf %53, %54 : vector<8x32xf32>
    %cst_31 = arith.constant 0.000000e+00 : f32
    %56 = vector.broadcast %cst_31 : f32 to vector<8x32xf32>
    %57 = arith.subf %56, %55 : vector<8x32xf32>
    %58 = math.exp %57 : vector<8x32xf32>
    %cst_32 = arith.constant 1.000000e+00 : f32
    %59 = vector.broadcast %cst_32 : f32 to vector<8x32xf32>
    %60 = arith.addf %59, %58 : vector<8x32xf32>
    %61 = tpu.reciprocal %60 {approx = true} : vector<8x32xf32> -> vector<8x32xf32>
    %62 = vector.broadcast %1 : f32 to vector<8x32xf32>
    %63 = arith.addf %0, %62 : vector<8x32xf32>
    %cst_33 = arith.constant 0.000000e+00 : f32
    %64 = vector.broadcast %cst_33 : f32 to vector<8x32xf32>
    %65 = arith.maximumf %55, %64 : vector<8x32xf32>
    %66 = arith.mulf %55, %63 : vector<8x32xf32>
    %67 = arith.subf %65, %66 : vector<8x32xf32>
    %68 = math.absf %55 : vector<8x32xf32>
    %cst_34 = arith.constant 0.000000e+00 : f32
    %69 = vector.broadcast %cst_34 : f32 to vector<8x32xf32>
    %70 = arith.subf %69, %68 : vector<8x32xf32>
    %71 = math.exp %70 : vector<8x32xf32>
    %cst_35 = arith.constant 1.000000e+00 : f32
    %72 = vector.broadcast %cst_35 : f32 to vector<8x32xf32>
    %73 = arith.addf %72, %71 : vector<8x32xf32>
    %74 = math.log %73 : vector<8x32xf32>
    %75 = arith.addf %67, %74 : vector<8x32xf32>
    %cst_36 = arith.constant dense<0.000000e+00> : vector<8xf32>
    %76 = vector.multi_reduction <add>, %75, %cst_36 [1] : vector<8x32xf32> to vector<8xf32>
    %77 = vector.shape_cast %76 : vector<8xf32> to vector<8x1xf32>
    %78 = arith.mulf %35, %35 : vector<8x8xf32>
    %79 = arith.mulf %18, %18 : vector<8x8xf32>
    %80 = arith.addf %78, %79 : vector<8x8xf32>
    %cst_37 = arith.constant 1.000000e+00 : f32
    %81 = vector.broadcast %cst_37 : f32 to vector<8x8xf32>
    %82 = arith.subf %80, %81 : vector<8x8xf32>
    %cst_38 = arith.constant dense<0.000000e+00> : vector<8xf32>
    %83 = vector.multi_reduction <add>, %82, %cst_38 [1] : vector<8x8xf32> to vector<8xf32>
    %84 = vector.shape_cast %83 : vector<8xf32> to vector<8x1xf32>
    %cst_39 = arith.constant 5.000000e-01 : f32
    %85 = vector.broadcast %cst_39 : f32 to vector<8x1xf32>
    %86 = arith.mulf %85, %84 : vector<8x1xf32>
    %87 = math.log %35 : vector<8x8xf32>
    %cst_40 = arith.constant dense<0.000000e+00> : vector<8xf32>
    %88 = vector.multi_reduction <add>, %87, %cst_40 [1] : vector<8x8xf32> to vector<8xf32>
    %89 = vector.shape_cast %88 : vector<8xf32> to vector<8x1xf32>
    %90 = arith.subf %86, %89 : vector<8x1xf32>
    %cst_41 = arith.constant dense<0.000000e+00> : vector<1xf32>
    %91 = vector.multi_reduction <add>, %77, %cst_41 [0] : vector<8x1xf32> to vector<1xf32>
    %92 = vector.shape_cast %91 : vector<1xf32> to vector<1x1xf32>
    %cst_42 = arith.constant 8.000000e+00 : f32
    %93 = vector.broadcast %cst_42 : f32 to vector<1x1xf32>
    %94 = arith.divf %92, %93 : vector<1x1xf32>
    %cst_43 = arith.constant dense<0.000000e+00> : vector<1xf32>
    %95 = vector.multi_reduction <add>, %90, %cst_43 [0] : vector<8x1xf32> to vector<1xf32>
    %96 = vector.shape_cast %95 : vector<1xf32> to vector<1x1xf32>
    %cst_44 = arith.constant 8.000000e+00 : f32
    %97 = vector.broadcast %cst_44 : f32 to vector<1x1xf32>
    %98 = arith.divf %96, %97 : vector<1x1xf32>
    %99 = tpu.iota {dimensions = array<i32: 1>} : vector<1x2xi32>
    %c0_i32 = arith.constant 0 : i32
    %100 = vector.broadcast %c0_i32 : i32 to vector<1x2xi32>
    %101 = arith.cmpi eq, %99, %100 : vector<1x2xi32>
    %102 = vector.shape_cast %94 : vector<1x1xf32> to vector<1x1xf32>
    %103 = vector.broadcast %102 : vector<1x1xf32> to vector<1x2xf32>
    %104 = vector.shape_cast %98 : vector<1x1xf32> to vector<1x1xf32>
    %105 = vector.broadcast %104 : vector<1x1xf32> to vector<1x2xf32>
    %106 = arith.select %101, %103, %105 : vector<1x2xi1>, vector<1x2xf32>
    %c0_45 = arith.constant 0 : index
    %c0_46 = arith.constant 0 : index
    %107 = vector.load %arg9[%c0_45, %c0_46] : memref<1x2xf32, #tpu.memory_space<vmem>>, vector<1x2xf32>
    tpu.vector_store %arg9[%c0_45, %c0_46], %106 {strides = array<i32>} : memref<1x2xf32, #tpu.memory_space<vmem>>, vector<1x2xf32>,
    %c0_47 = arith.constant 0 : index
    %c0_48 = arith.constant 0 : index
    %108 = vector.load %arg5[%c0_47, %c0_48] : memref<8x8xf32, #tpu.memory_space<vmem>>, vector<8x8xf32>
    tpu.vector_store %arg5[%c0_47, %c0_48], %18 {strides = array<i32>} : memref<8x8xf32, #tpu.memory_space<vmem>>, vector<8x8xf32>,
    %c0_49 = arith.constant 0 : index
    %c0_50 = arith.constant 0 : index
    %109 = vector.load %arg6[%c0_49, %c0_50] : memref<8x8xf32, #tpu.memory_space<vmem>>, vector<8x8xf32>
    tpu.vector_store %arg6[%c0_49, %c0_50], %35 {strides = array<i32>} : memref<8x8xf32, #tpu.memory_space<vmem>>, vector<8x8xf32>,
    %c0_51 = arith.constant 0 : index
    %c0_52 = arith.constant 0 : index
    %110 = vector.load %arg7[%c0_51, %c0_52] : memref<8x8xf32, #tpu.memory_space<vmem>>, vector<8x8xf32>
    tpu.vector_store %arg7[%c0_51, %c0_52], %38 {strides = array<i32>} : memref<8x8xf32, #tpu.memory_space<vmem>>, vector<8x8xf32>,
    %c0_53 = arith.constant 0 : index
    %c0_54 = arith.constant 0 : index
    %111 = vector.load %arg8[%c0_53, %c0_54] : memref<8x32xf32, #tpu.memory_space<vmem>>, vector<8x32xf32>
    tpu.vector_store %arg8[%c0_53, %c0_54], %61 {strides = array<i32>} : memref<8x32xf32, #tpu.memory_space<vmem>>, vector<8x32xf32>,
    return
  }
}

</mosaic_0001>

<llo_original>
// kernel: bvae_forward.1
$region0: #{bvae_forward.1}
  #allocation0 [shape = 'u32[]', space=smem, size = 0x4, offset = 0x4, fixed_abs, tag = 'smem constant byte address 0x4 - core index']
  #allocation1 [shape = 'u32[144,128]{1,0:T(1,128)}', space=vmem, size = 0x12000, scoped, tag = 'internal scratch']
  #allocation2 [shape = 'f32[1]{0:T(128)S(6)}', space=smem, size = 0x200, scoped, tag = 'scoped memory for bvae_forward.1']
  %s0 = inlined_call_operand.<no memory space> [shape: f32[1], index: 0, kind: input, shape index: {}]
  %s1 = inlined_call_operand.vmem [shape: f32[8,32], index: 1, kind: input, shape index: {}]
  %s2 = inlined_call_operand.vmem [shape: f32[8,8], index: 2, kind: input, shape index: {}]
  %s3 = inlined_call_operand.vmem [shape: f32[152,32], index: 3, kind: input, shape index: {}]
  %s4 = inlined_call_operand.vmem [shape: f32[56,32], index: 4, kind: input, shape index: {}]
  %s5 = inlined_call_operand.hbm [shape: f32[8,8], index: 5, kind: output, shape index: {0}]
  %s6 = inlined_call_operand.hbm [shape: f32[8,8], index: 6, kind: output, shape index: {1}]
  %s7 = inlined_call_operand.hbm [shape: f32[8,8], index: 7, kind: output, shape index: {2}]
  %s8 = inlined_call_operand.hbm [shape: f32[8,32], index: 8, kind: output, shape index: {3}]
  %s9 = inlined_call_operand.vmem [shape: f32[1,2], index: 9, kind: output, shape index: {4}]
  %10 = xla_tuple %s5, %s6, %s7, %s8, %s9
  %s11 = sld [smem:[#allocation0]]
  $region62: #{bvae_forward.1} parent=0
    _
  %s13 = ssub.s32 1, %s11
  %s14 = scalar_select 0, %s13, %s11
  %15 = sst [smem:[#allocation2]] %s0
  $region1: #{bvae_forward.1} parent=0
    #allocation3 [shape = 'u8[4096]{0}', space=vmem, size = 0x1000, scoped, tag = 'output window, operand 0, single buffered']
    #allocation4 [shape = 's32[1]{0}', space=sflag, size = 0x4, scoped, tag = 'scoped memory for bvae_forward.1']
    #allocation5 [shape = 'u8[4096]{0}', space=vmem, size = 0x1000, scoped, tag = 'output window, operand 1, single buffered']
    #allocation6 [shape = 's32[1]{0}', space=sflag, size = 0x4, scoped, tag = 'scoped memory for bvae_forward.1']
    #allocation7 [shape = 'u8[4096]{0}', space=vmem, size = 0x1000, scoped, tag = 'output window, operand 2, single buffered']
    #allocation8 [shape = 'u8[4096]{0}', space=vmem, size = 0x1000, scoped, tag = 'output window, operand 3, single buffered']
    #allocation9 [shape = 's32[1]{0}', space=sflag, size = 0x4, scoped, tag = 'scoped memory for bvae_forward.1']
    %16 = vsyncpa [#allocation4], 0
    %17 = vsyncpa [#allocation6], 0
    %18 = vsyncpa [#allocation9], 0
    // Predicated region
    $region2: #{bvae_forward.1} parent=1 // pred_check
      _
    $region3: #{bvae_forward.1} parent=1 // pred_check_branch
      %20 = sbr.rel (0) target = $region5
    $region4: #{bvae_forward.1} parent=1 // pred_region
      _
    $region5: #{bvae_forward.1} parent=1 // pred_fallthru
      _
    // Predicated region
    $region6: #{bvae_forward.1} parent=1 // pred_check
      _
    $region7: #{bvae_forward.1} parent=1 // pred_check_branch
      %22 = sbr.rel (0) target = $region9
    $region8: #{bvae_forward.1} parent=1 // pred_region
      _
    $region9: #{bvae_forward.1} parent=1 // pred_fallthru
      _
    // Predicated region
    $region10: #{bvae_forward.1} parent=1 // pred_check
      _
    $region11: #{bvae_forward.1} parent=1 // pred_check_branch
      %24 = sbr.rel (0) target = $region13
    $region12: #{bvae_forward.1} parent=1 // pred_region
      _
    $region13: #{bvae_forward.1} parent=1 // pred_fallthru
      _
    // Predicated region
    $region14: #{bvae_forward.1} parent=1 // pred_check
      _
    $region15: #{bvae_forward.1} parent=1 // pred_check_branch
      %26 = sbr.rel (0) target = $region17
    $region16: #{bvae_forward.1} parent=1 // pred_region
      _
    $region17: #{bvae_forward.1} parent=1 // pred_fallthru
      _
    // Predicated region
    $region18: #{bvae_forward.1} parent=1 // pred_check
      _
    $region19: #{bvae_forward.1} parent=1 // pred_check_branch
      %28 = sbr.rel (0) target = $region21
    $region20: #{bvae_forward.1} parent=1 // pred_region
      _
    $region21: #{bvae_forward.1} parent=1 // pred_fallthru
      _
    %v29 = vld [vmem:[%s1] sm:$0xff]
    %s30 = sld [smem:[#allocation2]]
    %v31 = vld [vmem:[%s3] sm:$0xff]
    %v32 = vld [vmem:[%s3 + $0x8] sm:$0xff]
    %v33 = vld [vmem:[%s3 + $0x10] sm:$0xff]
    %v34 = vld [vmem:[%s3 + $0x18] sm:$0xff]
    %v35 = vld [vmem:[%s4] sm:$0x1]
    %v36 = vlaneseq
    %v37 = vshrl.u32 %v36, 7
    %v38 = vsub.s32 0, %v37
    %v39 = vrot.slane %v35, %v38
    %vm40 = vcmask 261120
    %v42 = vsel %vm40, %v29, 0
    %44 = vmatprep.subr.mxu0 0.0
    %45 = vmatpush1.msra.mxu0 0.0
    %46 = vmatprep.subr.mxu0 0.0
    %47 = vmatpush1.msra.mxu0 0.0
    %48 = vmatprep.subr.mxu0 0.0
    %49 = vmatpush1.msra.mxu0 0.0
    %50 = vmatprep.subr.mxu0 0.0
    %51 = vmatpush1.msra.mxu0 0.0
    %52 = vmatprep.subr.mxu0 0.0
    %53 = vmatpush1.msra.mxu0 0.0
    %54 = vmatprep.subr.mxu0 0.0
    %55 = vmatpush1.msra.mxu0 0.0
    %56 = vmatprep.subr.mxu0 0.0
    %57 = vmatpush1.msra.mxu0 0.0
    %58 = vmatprep.subr.mxu0 0.0
    %59 = vmatpush1.msra.mxu0 0.0
    %60 = vmatprep.subr.mxu0 0.0
    %61 = vmatpush1.msra.mxu0 0.0
    %62 = vmatprep.subr.mxu0 0.0
    %63 = vmatpush1.msra.mxu0 0.0
    %64 = vmatprep.subr.mxu0 0.0
    %65 = vmatpush1.msra.mxu0 0.0
    %66 = vmatprep.subr.mxu0 0.0
    %67 = vmatpush1.msra.mxu0 0.0
    %68 = vmatprep.subr.mxu0 0.0
    %69 = vmatpush1.msra.mxu0 %v34
    %70 = vmatprep.subr.mxu0 0.0
    %71 = vmatpush1.msra.mxu0 %v33
    %72 = vmatprep.subr.mxu0 0.0
    %73 = vmatpush1.msra.mxu0 %v32
    %74 = vmatprep.subr.mxu0 0.0
    %75 = vmatpush1.msra.mxu0 %v31
    %76 = vmatprep.subr.mxu0 0.0
    %77 = vmatpush2.msra.mxu0 0.0
    %78 = vmatprep.subr.mxu0 0.0
    %79 = vmatpush2.msra.mxu0 0.0
    %80 = vmatprep.subr.mxu0 0.0
    %81 = vmatpush2.msra.mxu0 0.0
    %82 = vmatprep.subr.mxu0 0.0
    %83 = vmatpush2.msra.mxu0 0.0
    %84 = vmatprep.subr.mxu0 0.0
    %85 = vmatpush2.msra.mxu0 0.0
    %86 = vmatprep.subr.mxu0 0.0
    %87 = vmatpush2.msra.mxu0 0.0
    %88 = vmatprep.subr.mxu0 0.0
    %89 = vmatpush2.msra.mxu0 0.0
    %90 = vmatprep.subr.mxu0 0.0
    %91 = vmatpush2.msra.mxu0 0.0
    %92 = vmatprep.subr.mxu0 0.0
    %93 = vmatpush2.msra.mxu0 0.0
    %94 = vmatprep.subr.mxu0 0.0
    %95 = vmatpush2.msra.mxu0 0.0
    %96 = vmatprep.subr.mxu0 0.0
    %97 = vmatpush2.msra.mxu0 0.0
    %98 = vmatprep.subr.mxu0 0.0
    %99 = vmatpush2.msra.mxu0 0.0
    %100 = vmatprep.subr.mxu0 0.0
    %101 = vmatpush2.msra.mxu0 0.0
    %102 = vmatprep.subr.mxu0 0.0
    %103 = vmatpush2.msra.mxu0 0.0
    %104 = vmatprep.subr.mxu0 0.0
    %105 = vmatpush2.msra.mxu0 0.0
    %106 = vmatprep.subr.mxu0 0.0
    %107 = vmatpush2.msra.mxu0 0.0
    %108 = vmatprep.mubr.f32.mxu0 0.0
    %109 = vmatmul.mubr.f32.gmra.mxu0 %v42
    %v110 = vpop.f32.mrf.mxu0
    %v111 = vadd.f32 %v39, %v110
    %v112 = vpop.f32.mrf.mxu0
    %113 = vdwg.mxu0
    %v114 = vtanh.pop %v111
    %v115 = vld [vmem:[%s3 + $0x20] sm:$0xff]
    %v116 = vld [vmem:[%s3 + $0x28] sm:$0xff]
    %v117 = vld [vmem:[%s3 + $0x30] sm:$0xff]
    %v118 = vld [vmem:[%s3 + $0x38] sm:$0xff]
    %v119 = vld [vmem:[%s4 + $0x8] sm:$0x1]
    %v120 = vlaneseq
    %v121 = vshrl.u32 %v120, 7
    %v122 = vsub.s32 0, %v121
    %v123 = vrot.slane %v119, %v122
    %v125 = vsel %vm40, %v114, 0
    %127 = vmatprep.subr.mxu0 0.0
    %128 = vmatpush1.msra.mxu0 0.0
    %129 = vmatprep.subr.mxu0 0.0
    %130 = vmatpush1.msra.mxu0 0.0
    %131 = vmatprep.subr.mxu0 0.0
    %132 = vmatpush1.msra.mxu0 0.0
    %133 = vmatprep.subr.mxu0 0.0
    %134 = vmatpush1.msra.mxu0 0.0
    %135 = vmatprep.subr.mxu0 0.0
    %136 = vmatpush1.msra.mxu0 0.0
    %137 = vmatprep.subr.mxu0 0.0
    %138 = vmatpush1.msra.mxu0 0.0
    %139 = vmatprep.subr.mxu0 0.0
    %140 = vmatpush1.msra.mxu0 0.0
    %141 = vmatprep.subr.mxu0 0.0
    %142 = vmatpush1.msra.mxu0 0.0
    %143 = vmatprep.subr.mxu0 0.0
    %144 = vmatpush1.msra.mxu0 0.0
    %145 = vmatprep.subr.mxu0 0.0
    %146 = vmatpush1.msra.mxu0 0.0
    %147 = vmatprep.subr.mxu0 0.0
    %148 = vmatpush1.msra.mxu0 0.0
    %149 = vmatprep.subr.mxu0 0.0
    %150 = vmatpush1.msra.mxu0 0.0
    %151 = vmatprep.subr.mxu0 0.0
    %152 = vmatpush1.msra.mxu0 %v118
    %153 = vmatprep.subr.mxu0 0.0
    %154 = vmatpush1.msra.mxu0 %v117
    %155 = vmatprep.subr.mxu0 0.0
    %156 = vmatpush1.msra.mxu0 %v116
    %157 = vmatprep.subr.mxu0 0.0
    %158 = vmatpush1.msra.mxu0 %v115
    %159 = vmatprep.subr.mxu0 0.0
    %160 = vmatpush2.msra.mxu0 0.0
    %161 = vmatprep.subr.mxu0 0.0
    %162 = vmatpush2.msra.mxu0 0.0
    %163 = vmatprep.subr.mxu0 0.0
    %164 = vmatpush2.msra.mxu0 0.0
    %165 = vmatprep.subr.mxu0 0.0
    %166 = vmatpush2.msra.mxu0 0.0
    %167 = vmatprep.subr.mxu0 0.0
    %168 = vmatpush2.msra.mxu0 0.0
    %169 = vmatprep.subr.mxu0 0.0
    %170 = vmatpush2.msra.mxu0 0.0
    %171 = vmatprep.subr.mxu0 0.0
    %172 = vmatpush2.msra.mxu0 0.0
    %173 = vmatprep.subr.mxu0 0.0
    %174 = vmatpush2.msra.mxu0 0.0
    %175 = vmatprep.subr.mxu0 0.0
    %176 = vmatpush2.msra.mxu0 0.0
    %177 = vmatprep.subr.mxu0 0.0
    %178 = vmatpush2.msra.mxu0 0.0
    %179 = vmatprep.subr.mxu0 0.0
    %180 = vmatpush2.msra.mxu0 0.0
    %181 = vmatprep.subr.mxu0 0.0
    %182 = vmatpush2.msra.mxu0 0.0
    %183 = vmatprep.subr.mxu0 0.0
    %184 = vmatpush2.msra.mxu0 0.0
    %185 = vmatprep.subr.mxu0 0.0
    %186 = vmatpush2.msra.mxu0 0.0
    %187 = vmatprep.subr.mxu0 0.0
    %188 = vmatpush2.msra.mxu0 0.0
    %189 = vmatprep.subr.mxu0 0.0
    %190 = vmatpush2.msra.mxu0 0.0
    %191 = vmatprep.mubr.f32.mxu0 0.0
    %192 = vmatmul.mubr.f32.gmra.mxu0 %v125
    %v193 = vpop.f32.mrf.mxu0
    %v194 = vadd.f32 %v123, %v193
    %v195 = vpop.f32.mrf.mxu0
    %196 = vdwg.mxu0
    %v197 = vtanh.pop %v194
    %v198 = vld [vmem:[%s3 + $0x40] sm:$0xff]
    %v199 = vld [vmem:[%s3 + $0x48] sm:$0xff]
    %v200 = vld [vmem:[%s4 + $0x10] sm:$0x1]
    %v201 = vlaneseq
    %v202 = vshrl.u32 %v201, 7
    %v203 = vsub.s32 0, %v202
    %v204 = vrot.slane %v200, %v203
    %vm205 = vcmask 130048
    %v207 = vsel %vm205, %v197, 0
    %209 = vmatprep.subr.mxu0 0.0
    %210 = vmatpush1.msra.mxu0 0.0
    %211 = vmatprep.subr.mxu0 0.0
    %212 = vmatpush1.msra.mxu0 0.0
    %213 = vmatprep.subr.mxu0 0.0
    %214 = vmatpush1.msra.mxu0 0.0
    %215 = vmatprep.subr.mxu0 0.0
    %216 = vmatpush1.msra.mxu0 0.0
    %217 = vmatprep.subr.mxu0 0.0
    %218 = vmatpush1.msra.mxu0 0.0
    %219 = vmatprep.subr.mxu0 0.0
    %220 = vmatpush1.msra.mxu0 0.0
    %221 = vmatprep.subr.mxu0 0.0
    %222 = vmatpush1.msra.mxu0 0.0
    %223 = vmatprep.subr.mxu0 0.0
    %224 = vmatpush1.msra.mxu0 0.0
    %225 = vmatprep.subr.mxu0 0.0
    %226 = vmatpush1.msra.mxu0 0.0
    %227 = vmatprep.subr.mxu0 0.0
    %228 = vmatpush1.msra.mxu0 0.0
    %229 = vmatprep.subr.mxu0 0.0
    %230 = vmatpush1.msra.mxu0 0.0
    %231 = vmatprep.subr.mxu0 0.0
    %232 = vmatpush1.msra.mxu0 0.0
    %233 = vmatprep.subr.mxu0 0.0
    %234 = vmatpush1.msra.mxu0 0.0
    %235 = vmatprep.subr.mxu0 0.0
    %236 = vmatpush1.msra.mxu0 0.0
    %237 = vmatprep.subr.mxu0 0.0
    %238 = vmatpush1.msra.mxu0 %v199
    %239 = vmatprep.subr.mxu0 0.0
    %240 = vmatpush1.msra.mxu0 %v198
    %241 = vmatprep.subr.mxu0 0.0
    %242 = vmatpush2.msra.mxu0 0.0
    %243 = vmatprep.subr.mxu0 0.0
    %244 = vmatpush2.msra.mxu0 0.0
    %245 = vmatprep.subr.mxu0 0.0
    %246 = vmatpush2.msra.mxu0 0.0
    %247 = vmatprep.subr.mxu0 0.0
    %248 = vmatpush2.msra.mxu0 0.0
    %249 = vmatprep.subr.mxu0 0.0
    %250 = vmatpush2.msra.mxu0 0.0
    %251 = vmatprep.subr.mxu0 0.0
    %252 = vmatpush2.msra.mxu0 0.0
    %253 = vmatprep.subr.mxu0 0.0
    %254 = vmatpush2.msra.mxu0 0.0
    %255 = vmatprep.subr.mxu0 0.0
    %256 = vmatpush2.msra.mxu0 0.0
    %257 = vmatprep.subr.mxu0 0.0
    %258 = vmatpush2.msra.mxu0 0.0
    %259 = vmatprep.subr.mxu0 0.0
    %260 = vmatpush2.msra.mxu0 0.0
    %261 = vmatprep.subr.mxu0 0.0
    %262 = vmatpush2.msra.mxu0 0.0
    %263 = vmatprep.subr.mxu0 0.0
    %264 = vmatpush2.msra.mxu0 0.0
    %265 = vmatprep.subr.mxu0 0.0
    %266 = vmatpush2.msra.mxu0 0.0
    %267 = vmatprep.subr.mxu0 0.0
    %268 = vmatpush2.msra.mxu0 0.0
    %269 = vmatprep.subr.mxu0 0.0
    %270 = vmatpush2.msra.mxu0 0.0
    %271 = vmatprep.subr.mxu0 0.0
    %272 = vmatpush2.msra.mxu0 0.0
    %273 = vmatprep.mubr.f32.mxu0 0.0
    %274 = vmatmul.mubr.f32.gmra.mxu0 %v207
    %v275 = vpop.f32.mrf.mxu0
    %v276 = vadd.f32 %v204, %v275
    %v277 = vpop.f32.mrf.mxu0
    %278 = vdwg.mxu0
    %v279 = vld [vmem:[%s3 + $0x50] sm:$0xff]
    %v280 = vld [vmem:[%s3 + $0x58] sm:$0xff]
    %v281 = vld [vmem:[%s4 + $0x18] sm:$0x1]
    %v282 = vlaneseq
    %v283 = vshrl.u32 %v282, 7
    %v284 = vsub.s32 0, %v283
    %v285 = vrot.slane %v281, %v284
    %286 = vmatprep.subr.mxu0 0.0
    %287 = vmatpush1.msra.mxu0 0.0
    %288 = vmatprep.subr.mxu0 0.0
    %289 = vmatpush1.msra.mxu0 0.0
    %290 = vmatprep.subr.mxu0 0.0
    %291 = vmatpush1.msra.mxu0 0.0
    %292 = vmatprep.subr.mxu0 0.0
    %293 = vmatpush1.msra.mxu0 0.0
    %294 = vmatprep.subr.mxu0 0.0
    %295 = vmatpush1.msra.mxu0 0.0
    %296 = vmatprep.subr.mxu0 0.0
    %297 = vmatpush1.msra.mxu0 0.0
    %298 = vmatprep.subr.mxu0 0.0
    %299 = vmatpush1.msra.mxu0 0.0
    %300 = vmatprep.subr.mxu0 0.0
    %301 = vmatpush1.msra.mxu0 0.0
    %302 = vmatprep.subr.mxu0 0.0
    %303 = vmatpush1.msra.mxu0 0.0
    %304 = vmatprep.subr.mxu0 0.0
    %305 = vmatpush1.msra.mxu0 0.0
    %306 = vmatprep.subr.mxu0 0.0
    %307 = vmatpush1.msra.mxu0 0.0
    %308 = vmatprep.subr.mxu0 0.0
    %309 = vmatpush1.msra.mxu0 0.0
    %310 = vmatprep.subr.mxu0 0.0
    %311 = vmatpush1.msra.mxu0 0.0
    %312 = vmatprep.subr.mxu0 0.0
    %313 = vmatpush1.msra.mxu0 0.0
    %314 = vmatprep.subr.mxu0 0.0
    %315 = vmatpush1.msra.mxu0 %v280
    %316 = vmatprep.subr.mxu0 0.0
    %317 = vmatpush1.msra.mxu0 %v279
    %318 = vmatprep.subr.mxu0 0.0
    %319 = vmatpush2.msra.mxu0 0.0
    %320 = vmatprep.subr.mxu0 0.0
    %321 = vmatpush2.msra.mxu0 0.0
    %322 = vmatprep.subr.mxu0 0.0
    %323 = vmatpush2.msra.mxu0 0.0
    %324 = vmatprep.subr.mxu0 0.0
    %325 = vmatpush2.msra.mxu0 0.0
    %326 = vmatprep.subr.mxu0 0.0
    %327 = vmatpush2.msra.mxu0 0.0
    %328 = vmatprep.subr.mxu0 0.0
    %329 = vmatpush2.msra.mxu0 0.0
    %330 = vmatprep.subr.mxu0 0.0
    %331 = vmatpush2.msra.mxu0 0.0
    %332 = vmatprep.subr.mxu0 0.0
    %333 = vmatpush2.msra.mxu0 0.0
    %334 = vmatprep.subr.mxu0 0.0
    %335 = vmatpush2.msra.mxu0 0.0
    %336 = vmatprep.subr.mxu0 0.0
    %337 = vmatpush2.msra.mxu0 0.0
    %338 = vmatprep.subr.mxu0 0.0
    %339 = vmatpush2.msra.mxu0 0.0
    %340 = vmatprep.subr.mxu0 0.0
    %341 = vmatpush2.msra.mxu0 0.0
    %342 = vmatprep.subr.mxu0 0.0
    %343 = vmatpush2.msra.mxu0 0.0
    %344 = vmatprep.subr.mxu0 0.0
    %345 = vmatpush2.msra.mxu0 0.0
    %346 = vmatprep.subr.mxu0 0.0
    %347 = vmatpush2.msra.mxu0 0.0
    %348 = vmatprep.subr.mxu0 0.0
    %349 = vmatpush2.msra.mxu0 0.0
    %350 = vmatprep.mubr.f32.mxu0 0.0
    %351 = vmatmul.mubr.f32.gmra.mxu0 %v207
    %v352 = vpop.f32.mrf.mxu0
    %v353 = vadd.f32 %v285, %v352
    %v354 = vpop.f32.mrf.mxu0
    %355 = vdwg.mxu0
    %v356 = vmax.f32 %v353, 0.0
    %v357 = vand.u32 2147483647, %v353
    %v358 = vsub.f32 0.0, %v357
    %v359 = vmul.f32 %v358, 1.442695
    %v360 = vpow.pop %v359
    %v361 = vadd.f32 %v360, 1.0
    %v362 = vlog2.pop %v361
    %v363 = vmul.f32 %v362, 0.6931472
    %v364 = vadd.f32 %v356, %v363
    %v365 = vadd.f32 %v364, 1e-08
    %v366 = vld [vmem:[%s2] sm:$0xff]
    %v367 = vmul.f32 %v365, %v366
    %v368 = vadd.f32 %v276, %v367
    %v369 = vld [vmem:[%s3 + $0x60] sm:$0xff]
    %v370 = vld [vmem:[%s4 + $0x20] sm:$0x1]
    %v371 = vlaneseq
    %v372 = vshrl.u32 %v371, 7
    %v373 = vsub.s32 0, %v372
    %v374 = vrot.slane %v370, %v373
    %vm375 = vcmask 64512
    %v377 = vsel %vm375, %v368, 0
    %379 = vmatprep.subr.mxu0 0.0
    %380 = vmatpush1.msra.mxu0 0.0
    %381 = vmatprep.subr.mxu0 0.0
    %382 = vmatpush1.msra.mxu0 0.0
    %383 = vmatprep.subr.mxu0 0.0
    %384 = vmatpush1.msra.mxu0 0.0
    %385 = vmatprep.subr.mxu0 0.0
    %386 = vmatpush1.msra.mxu0 0.0
    %387 = vmatprep.subr.mxu0 0.0
    %388 = vmatpush1.msra.mxu0 0.0
    %389 = vmatprep.subr.mxu0 0.0
    %390 = vmatpush1.msra.mxu0 0.0
    %391 = vmatprep.subr.mxu0 0.0
    %392 = vmatpush1.msra.mxu0 0.0
    %393 = vmatprep.subr.mxu0 0.0
    %394 = vmatpush1.msra.mxu0 0.0
    %395 = vmatprep.subr.mxu0 0.0
    %396 = vmatpush1.msra.mxu0 0.0
    %397 = vmatprep.subr.mxu0 0.0
    %398 = vmatpush1.msra.mxu0 0.0
    %399 = vmatprep.subr.mxu0 0.0
    %400 = vmatpush1.msra.mxu0 0.0
    %401 = vmatprep.subr.mxu0 0.0
    %402 = vmatpush1.msra.mxu0 0.0
    %403 = vmatprep.subr.mxu0 0.0
    %404 = vmatpush1.msra.mxu0 0.0
    %405 = vmatprep.subr.mxu0 0.0
    %406 = vmatpush1.msra.mxu0 0.0
    %407 = vmatprep.subr.mxu0 0.0
    %408 = vmatpush1.msra.mxu0 0.0
    %409 = vmatprep.subr.mxu0 0.0
    %410 = vmatpush1.msra.mxu0 %v369
    %411 = vmatprep.subr.mxu0 0.0
    %412 = vmatpush2.msra.mxu0 0.0
    %413 = vmatprep.subr.mxu0 0.0
    %414 = vmatpush2.msra.mxu0 0.0
    %415 = vmatprep.subr.mxu0 0.0
    %416 = vmatpush2.msra.mxu0 0.0
    %417 = vmatprep.subr.mxu0 0.0
    %418 = vmatpush2.msra.mxu0 0.0
    %419 = vmatprep.subr.mxu0 0.0
    %420 = vmatpush2.msra.mxu0 0.0
    %421 = vmatprep.subr.mxu0 0.0
    %422 = vmatpush2.msra.mxu0 0.0
    %423 = vmatprep.subr.mxu0 0.0
    %424 = vmatpush2.msra.mxu0 0.0
    %425 = vmatprep.subr.mxu0 0.0
    %426 = vmatpush2.msra.mxu0 0.0
    %427 = vmatprep.subr.mxu0 0.0
    %428 = vmatpush2.msra.mxu0 0.0
    %429 = vmatprep.subr.mxu0 0.0
    %430 = vmatpush2.msra.mxu0 0.0
    %431 = vmatprep.subr.mxu0 0.0
    %432 = vmatpush2.msra.mxu0 0.0
    %433 = vmatprep.subr.mxu0 0.0
    %434 = vmatpush2.msra.mxu0 0.0
    %435 = vmatprep.subr.mxu0 0.0
    %436 = vmatpush2.msra.mxu0 0.0
    %437 = vmatprep.subr.mxu0 0.0
    %438 = vmatpush2.msra.mxu0 0.0
    %439 = vmatprep.subr.mxu0 0.0
    %440 = vmatpush2.msra.mxu0 0.0
    %441 = vmatprep.subr.mxu0 0.0
    %442 = vmatpush2.msra.mxu0 0.0
    %443 = vmatprep.mubr.f32.mxu0 0.0
    %444 = vmatmul.mubr.f32.gmra.mxu0 %v377
    %v445 = vpop.f32.mrf.mxu0
    %v446 = vadd.f32 %v374, %v445
    %v447 = vpop.f32.mrf.mxu0
    %448 = vdwg.mxu0
    %v449 = vtanh.pop %v446
    %v450 = vld [vmem:[%s3 + $0x68] sm:$0xff]
    %v451 = vld [vmem:[%s3 + $0x70] sm:$0xff]
    %v452 = vld [vmem:[%s4 + $0x28] sm:$0x1]
    %v453 = vlaneseq
    %v454 = vshrl.u32 %v453, 7
    %v455 = vsub.s32 0, %v454
    %v456 = vrot.slane %v452, %v455
    %v458 = vsel %vm205, %v449, 0
    %460 = vmatprep.subr.mxu0 0.0
    %461 = vmatpush1.msra.mxu0 0.0
    %462 = vmatprep.subr.mxu0 0.0
    %463 = vmatpush1.msra.mxu0 0.0
    %464 = vmatprep.subr.mxu0 0.0
    %465 = vmatpush1.msra.mxu0 0.0
    %466 = vmatprep.subr.mxu0 0.0
    %467 = vmatpush1.msra.mxu0 0.0
    %468 = vmatprep.subr.mxu0 0.0
    %469 = vmatpush1.msra.mxu0 0.0
    %470 = vmatprep.subr.mxu0 0.0
    %471 = vmatpush1.msra.mxu0 0.0
    %472 = vmatprep.subr.mxu0 0.0
    %473 = vmatpush1.msra.mxu0 0.0
    %474 = vmatprep.subr.mxu0 0.0
    %475 = vmatpush1.msra.mxu0 0.0
    %476 = vmatprep.subr.mxu0 0.0
    %477 = vmatpush1.msra.mxu0 0.0
    %478 = vmatprep.subr.mxu0 0.0
    %479 = vmatpush1.msra.mxu0 0.0
    %480 = vmatprep.subr.mxu0 0.0
    %481 = vmatpush1.msra.mxu0 0.0
    %482 = vmatprep.subr.mxu0 0.0
    %483 = vmatpush1.msra.mxu0 0.0
    %484 = vmatprep.subr.mxu0 0.0
    %485 = vmatpush1.msra.mxu0 0.0
    %486 = vmatprep.subr.mxu0 0.0
    %487 = vmatpush1.msra.mxu0 0.0
    %488 = vmatprep.subr.mxu0 0.0
    %489 = vmatpush1.msra.mxu0 %v451
    %490 = vmatprep.subr.mxu0 0.0
    %491 = vmatpush1.msra.mxu0 %v450
    %492 = vmatprep.subr.mxu0 0.0
    %493 = vmatpush2.msra.mxu0 0.0
    %494 = vmatprep.subr.mxu0 0.0
    %495 = vmatpush2.msra.mxu0 0.0
    %496 = vmatprep.subr.mxu0 0.0
    %497 = vmatpush2.msra.mxu0 0.0
    %498 = vmatprep.subr.mxu0 0.0
    %499 = vmatpush2.msra.mxu0 0.0
    %500 = vmatprep.subr.mxu0 0.0
    %501 = vmatpush2.msra.mxu0 0.0
    %502 = vmatprep.subr.mxu0 0.0
    %503 = vmatpush2.msra.mxu0 0.0
    %504 = vmatprep.subr.mxu0 0.0
    %505 = vmatpush2.msra.mxu0 0.0
    %506 = vmatprep.subr.mxu0 0.0
    %507 = vmatpush2.msra.mxu0 0.0
    %508 = vmatprep.subr.mxu0 0.0
    %509 = vmatpush2.msra.mxu0 0.0
    %510 = vmatprep.subr.mxu0 0.0
    %511 = vmatpush2.msra.mxu0 0.0
    %512 = vmatprep.subr.mxu0 0.0
    %513 = vmatpush2.msra.mxu0 0.0
    %514 = vmatprep.subr.mxu0 0.0
    %515 = vmatpush2.msra.mxu0 0.0
    %516 = vmatprep.subr.mxu0 0.0
    %517 = vmatpush2.msra.mxu0 0.0
    %518 = vmatprep.subr.mxu0 0.0
    %519 = vmatpush2.msra.mxu0 0.0
    %520 = vmatprep.subr.mxu0 0.0
    %521 = vmatpush2.msra.mxu0 0.0
    %522 = vmatprep.subr.mxu0 0.0
    %523 = vmatpush2.msra.mxu0 0.0
    %524 = vmatprep.mubr.f32.mxu0 0.0
    %525 = vmatmul.mubr.f32.gmra.mxu0 %v458
    %v526 = vpop.f32.mrf.mxu0
    %v527 = vadd.f32 %v456, %v526
    %v528 = vpop.f32.mrf.mxu0
    %529 = vdwg.mxu0
    %v530 = vtanh.pop %v527
    %v531 = vld [vmem:[%s3 + $0x78] sm:$0xff]
    %v532 = vld [vmem:[%s3 + $0x80] sm:$0xff]
    %v533 = vld [vmem:[%s3 + $0x88] sm:$0xff]
    %v534 = vld [vmem:[%s3 + $0x90] sm:$0xff]
    %v535 = vld [vmem:[%s4 + $0x30] sm:$0x1]
    %v536 = vlaneseq
    %v537 = vshrl.u32 %v536, 7
    %v538 = vsub.s32 0, %v537
    %v539 = vrot.slane %v535, %v538
    %v541 = vsel %vm40, %v530, 0
    %543 = vmatprep.subr.mxu0 0.0
    %544 = vmatpush1.msra.mxu0 0.0
    %545 = vmatprep.subr.mxu0 0.0
    %546 = vmatpush1.msra.mxu0 0.0
    %547 = vmatprep.subr.mxu0 0.0
    %548 = vmatpush1.msra.mxu0 0.0
    %549 = vmatprep.subr.mxu0 0.0
    %550 = vmatpush1.msra.mxu0 0.0
    %551 = vmatprep.subr.mxu0 0.0
    %552 = vmatpush1.msra.mxu0 0.0
    %553 = vmatprep.subr.mxu0 0.0
    %554 = vmatpush1.msra.mxu0 0.0
    %555 = vmatprep.subr.mxu0 0.0
    %556 = vmatpush1.msra.mxu0 0.0
    %557 = vmatprep.subr.mxu0 0.0
    %558 = vmatpush1.msra.mxu0 0.0
    %559 = vmatprep.subr.mxu0 0.0
    %560 = vmatpush1.msra.mxu0 0.0
    %561 = vmatprep.subr.mxu0 0.0
    %562 = vmatpush1.msra.mxu0 0.0
    %563 = vmatprep.subr.mxu0 0.0
    %564 = vmatpush1.msra.mxu0 0.0
    %565 = vmatprep.subr.mxu0 0.0
    %566 = vmatpush1.msra.mxu0 0.0
    %567 = vmatprep.subr.mxu0 0.0
    %568 = vmatpush1.msra.mxu0 %v534
    %569 = vmatprep.subr.mxu0 0.0
    %570 = vmatpush1.msra.mxu0 %v533
    %571 = vmatprep.subr.mxu0 0.0
    %572 = vmatpush1.msra.mxu0 %v532
    %573 = vmatprep.subr.mxu0 0.0
    %574 = vmatpush1.msra.mxu0 %v531
    %575 = vmatprep.subr.mxu0 0.0
    %576 = vmatpush2.msra.mxu0 0.0
    %577 = vmatprep.subr.mxu0 0.0
    %578 = vmatpush2.msra.mxu0 0.0
    %579 = vmatprep.subr.mxu0 0.0
    %580 = vmatpush2.msra.mxu0 0.0
    %581 = vmatprep.subr.mxu0 0.0
    %582 = vmatpush2.msra.mxu0 0.0
    %583 = vmatprep.subr.mxu0 0.0
    %584 = vmatpush2.msra.mxu0 0.0
    %585 = vmatprep.subr.mxu0 0.0
    %586 = vmatpush2.msra.mxu0 0.0
    %587 = vmatprep.subr.mxu0 0.0
    %588 = vmatpush2.msra.mxu0 0.0
    %589 = vmatprep.subr.mxu0 0.0
    %590 = vmatpush2.msra.mxu0 0.0
    %591 = vmatprep.subr.mxu0 0.0
    %592 = vmatpush2.msra.mxu0 0.0
    %593 = vmatprep.subr.mxu0 0.0
    %594 = vmatpush2.msra.mxu0 0.0
    %595 = vmatprep.subr.mxu0 0.0
    %596 = vmatpush2.msra.mxu0 0.0
    %597 = vmatprep.subr.mxu0 0.0
    %598 = vmatpush2.msra.mxu0 0.0
    %599 = vmatprep.subr.mxu0 0.0
    %600 = vmatpush2.msra.mxu0 0.0
    %601 = vmatprep.subr.mxu0 0.0
    %602 = vmatpush2.msra.mxu0 0.0
    %603 = vmatprep.subr.mxu0 0.0
    %604 = vmatpush2.msra.mxu0 0.0
    %605 = vmatprep.subr.mxu0 0.0
    %606 = vmatpush2.msra.mxu0 0.0
    %607 = vmatprep.mubr.f32.mxu0 0.0
    %608 = vmatmul.mubr.f32.gmra.mxu0 %v541
    %v609 = vpop.f32.mrf.mxu0
    %v610 = vadd.f32 %v539, %v609
    %v611 = vpop.f32.mrf.mxu0
    %612 = vdwg.mxu0
    %v613 = vsub.f32 0.0, %v610
    %v614 = vmul.f32 %v613, 1.442695
    %v615 = vpow.pop %v614
    %v616 = vadd.f32 %v615, 1.0
    %v617 = vrcp.pop %v616
    %v618 = vstv %s30
    %v619 = vadd.f32 %v29, %v618
    %v620 = vmax.f32 %v610, 0.0
    %v621 = vmul.f32 %v610, %v619
    %v622 = vsub.f32 %v620, %v621
    %v623 = vand.u32 2147483647, %v610
    %v624 = vsub.f32 0.0, %v623
    %v625 = vmul.f32 %v624, 1.442695
    %v626 = vpow.pop %v625
    %v627 = vadd.f32 %v626, 1.0
    %v628 = vlog2.pop %v627
    %v629 = vmul.f32 %v628, 0.6931472
    %v630 = vadd.f32 %v622, %v629
    %v631 = vsel %vm40, %v630, 0.0
    %632 = vadd.xlane.f32.xlu0 %v631
    %v633 = vpop.xlane.xlu0 %632
    %v634 = vmul.f32 %v365, %v365
    %v635 = vmul.f32 %v276, %v276
    %v636 = vadd.f32 %v634, %v635
    %v637 = vsub.f32 %v636, 1.0
    %v638 = vsel %vm375, %v637, 0.0
    %639 = vadd.xlane.f32.xlu0 %v638
    %v640 = vpop.xlane.xlu0 %639
    %v641 = vmul.f32 %v640, 0.5
    %v642 = vlog2.pop %v365
    %v643 = vmul.f32 %v642, 0.6931472
    %v644 = vsel %vm375, %v643, 0.0
    %645 = vadd.xlane.f32.xlu0 %v644
    %v646 = vpop.xlane.xlu0 %645
    %v647 = vsub.f32 %v641, %v646
    %v648 = vrot.slane %v633, 4
    %v649 = vadd.f32 %v633, %v648
    %v650 = vrot.slane %v649, 2
    %v651 = vadd.f32 %v649, %v650
    %v652 = vrot.slane %v651, 1
    %v653 = vadd.f32 %v651, %v652
    %v654 = vrcp.pop 8.0
    %v655 = vmul.f32 %v653, %v654
    %v656 = vrot.slane %v647, 4
    %v657 = vadd.f32 %v647, %v656
    %v658 = vrot.slane %v657, 2
    %v659 = vadd.f32 %v657, %v658
    %v660 = vrot.slane %v659, 1
    %v661 = vadd.f32 %v659, %v660
    %v662 = vmul.f32 %v661, %v654
    %v663 = vlaneseq
    %v664 = vand.u32 %v663, 127
    %vm665 = vcmp.eq.s32.totalorder %v664, 0
    %v666 = vsel %vm665, %v655, %v662
    %vm667 = vcmask 8192
    %668 = vst.msk [vmem:[%s9] sm:$0x1] %vm667, %v666
    %669 = vst.msk [vmem:[#allocation3] sm:$0xff] %vm375, %v276
    %670 = vst.msk [vmem:[#allocation5] sm:$0xff] %vm375, %v365
    %671 = vst.msk [vmem:[#allocation7] sm:$0xff] %vm375, %v368
    %672 = vst.msk [vmem:[#allocation8] sm:$0xff] %vm40, %v617
    // Predicated region
    $region22: #{bvae_forward.1} parent=1 // pred_check
      _
    $region23: #{bvae_forward.1} parent=1 // pred_check_branch
      %674 = sbr.rel (0) target = $region25
    $region24: #{bvae_forward.1} parent=1 // pred_region
      %s676 = ssub.s32 128, 128
      %677 = vsyncadd [#allocation4], %s676
      %s679 = sshll.u32 [#allocation3], 4
      %s680 = int_to_ptr.vmem [resolvable:$true] %s679
      %682 = dma.vmem_to_hbm [thread:$0]  %s680, 128, %s5, [#allocation4]
    $region25: #{bvae_forward.1} parent=1 // pred_fallthru
      _
    // Predicated region
    $region26: #{bvae_forward.1} parent=1 // pred_check
      _
    $region27: #{bvae_forward.1} parent=1 // pred_check_branch
      %684 = sbr.rel (0) target = $region29
    $region28: #{bvae_forward.1} parent=1 // pred_region
      %s686 = ssub.s32 128, 128
      %687 = vsyncadd [#allocation6], %s686
      %s689 = sshll.u32 [#allocation5], 4
      %s690 = int_to_ptr.vmem [resolvable:$true] %s689
      %692 = dma.vmem_to_hbm [thread:$0]  %s690, 128, %s6, [#allocation6]
    $region29: #{bvae_forward.1} parent=1 // pred_fallthru
      _
    // Predicated region
    $region30: #{bvae_forward.1} parent=1 // pred_check
      _
    $region31: #{bvae_forward.1} parent=1 // pred_check_branch
      %694 = sbr.rel (0) target = $region33
    $region32: #{bvae_forward.1} parent=1 // pred_region
      %s696 = ssub.s32 128, 128
      %697 = vsyncadd [#allocation6], %s696
      %s699 = sshll.u32 [#allocation7], 4
      %s700 = int_to_ptr.vmem [resolvable:$true] %s699
      %702 = dma.vmem_to_hbm [thread:$0]  %s700, 128, %s7, [#allocation6]
    $region33: #{bvae_forward.1} parent=1 // pred_fallthru
      _
    // Predicated region
    $region34: #{bvae_forward.1} parent=1 // pred_check
      _
    $region35: #{bvae_forward.1} parent=1 // pred_check_branch
      %704 = sbr.rel (0) target = $region37
    $region36: #{bvae_forward.1} parent=1 // pred_region
      %s706 = ssub.s32 128, 128
      %707 = vsyncadd [#allocation9], %s706
      %s709 = sshll.u32 [#allocation8], 4
      %s710 = int_to_ptr.vmem [resolvable:$true] %s709
      %712 = dma.vmem_to_hbm [thread:$0]  %s710, 128, %s8, [#allocation9]
    $region37: #{bvae_forward.1} parent=1 // pred_fallthru
      _
    // Predicated region
    $region38: #{bvae_forward.1} parent=1 // pred_check
      _
    $region39: #{bvae_forward.1} parent=1 // pred_check_branch
      %714 = sbr.rel (0) target = $region41
    $region40: #{bvae_forward.1} parent=1 // pred_region
      _
    $region41: #{bvae_forward.1} parent=1 // pred_fallthru
      _
    // Predicated region
    $region42: #{bvae_forward.1} parent=1 // pred_check
      _
    $region43: #{bvae_forward.1} parent=1 // pred_check_branch
      %716 = sbr.rel (0) target = $region45
    $region44: #{bvae_forward.1} parent=1 // pred_region
      %717 = dma.done [#allocation4], 128
    $region45: #{bvae_forward.1} parent=1 // pred_fallthru
      _
    // Predicated region
    $region46: #{bvae_forward.1} parent=1 // pred_check
      _
    $region47: #{bvae_forward.1} parent=1 // pred_check_branch
      %719 = sbr.rel (0) target = $region49
    $region48: #{bvae_forward.1} parent=1 // pred_region
      %720 = dma.done [#allocation6], 128
    $region49: #{bvae_forward.1} parent=1 // pred_fallthru
      _
    // Predicated region
    $region50: #{bvae_forward.1} parent=1 // pred_check
      _
    $region51: #{bvae_forward.1} parent=1 // pred_check_branch
      %722 = sbr.rel (0) target = $region53
    $region52: #{bvae_forward.1} parent=1 // pred_region
      %723 = dma.done [#allocation6], 128
    $region53: #{bvae_forward.1} parent=1 // pred_fallthru
      _
    // Predicated region
    $region54: #{bvae_forward.1} parent=1 // pred_check
      _
    $region55: #{bvae_forward.1} parent=1 // pred_check_branch
      %725 = sbr.rel (0) target = $region57
    $region56: #{bvae_forward.1} parent=1 // pred_region
      %726 = dma.done [#allocation9], 128
    $region57: #{bvae_forward.1} parent=1 // pred_fallthru
      _
    // Predicated region
    $region58: #{bvae_forward.1} parent=1 // pred_check
      _
    $region59: #{bvae_forward.1} parent=1 // pred_check_branch
      %728 = sbr.rel (0) target = $region61
    $region60: #{bvae_forward.1} parent=1 // pred_region
      _
    $region61: #{bvae_forward.1} parent=1 // pred_fallthru
      _
    %729 = vsyncpa [#allocation4], 1
    %730 = vsyncpa [#allocation6], 1
    %731 = vsyncpa [#allocation9], 1

</llo_original>
